<compile_context>
chip_gen: v7x
topology: tpu7x:2x2x1
jax: 0.10.0
libtpu: 0.0.40
codegen_flags: <defaults>
</compile_context>

<pallas_src>
import functools

import numpy as np

import jax
import jax.numpy as jnp
from jax import lax
from jax.experimental import pallas as pl
from jax.experimental.pallas import tpu as pltpu


def _round_up(x, m):
    return ((x + m - 1) // m) * m


def _pinball_kernel(lab_ref, fcst_ref, out_ref, acc_ref, *,
                    q_values, valid_cols, tm, steps_per_split):
    """Grid = (num_splits [parallel], steps_per_split [arbitrary, reduction]).

    Blocks:
      lab_ref  : (tm, 128)      label tile (full sublane + lane utilization)
      fcst_ref : (Q, tm, 128)   forecast tile
      out_ref  : (1, 8, 128)    per-split partial-sum tile
      acc_ref  : (Q, tm, 128)   f32 vector accumulator (VPU adds only)
    """
    c = pl.program_id(0)
    i = pl.program_id(1)
    num_q = len(q_values)

    @pl.when(i == 0)
    def _():
        acc_ref[...] = jnp.zeros_like(acc_ref)

    lab = lab_ref[...]  # (tm, 128), input dtype

    # Per-quantile elementwise pinball loss.  Quantiles are Python-float scalar
    # compile-time constants (no captured array constants).  Subtract in the
    # input dtype (bf16-native VALU on v6e/v7x) and widen once to f32.
    losses = []
    for qi in range(num_q):
        qv = q_values[qi]
        err = (lab - fcst_ref[qi]).astype(jnp.float32)          # (tm, 128)
        losses.append(jnp.maximum(qv * err, (qv - 1.0) * err))

    # Unclamped position of this logical block along the (padded-to-128) M axis.
    row0 = (c * steps_per_split + i) * tm
    is_full = (row0 + tm) * 128 <= valid_cols

    @pl.when(is_full)
    def _():
        # Fast path: every element valid, pure VPU accumulate.
        for qi in range(num_q):
            acc_ref[qi] += losses[qi]

    @pl.when(jnp.logical_not(is_full))
    def _():
        # Partial (or duplicate / out-of-range) block: mask by global element id.
        ridx = lax.broadcasted_iota(jnp.int32, (tm, 128), 0)
        lidx = lax.broadcasted_iota(jnp.int32, (tm, 128), 1)
        gidx = (row0 + ridx) * 128 + lidx
        mask = gidx < valid_cols
        for qi in range(num_q):
            acc_ref[qi] += jnp.where(mask, losses[qi], 0.0)

    @pl.when(i == pl.num_programs(1) - 1)
    def _():
        partial = jnp.sum(acc_ref[...])          # single cross-lane reduce / split
        out_ref[...] = jnp.broadcast_to(partial, out_ref.shape)


def pinball_loss(label, forecasts, quantile, *, lanes_per_step=512 * 1024,
                 num_splits=1):
    """Pinball (quantile) loss, mean over all elements.

    label:     (B, T, 1) or (B, T)       — broadcast over the quantile axis.
    forecasts: (B, T, Q)
    quantile:  scalar or length-Q sequence of Python floats (compile-time const).
    lanes_per_step: elements of the M axis processed per grid step (sweep knob).
                    Default 512K lanes ≈ 22 MiB total VMEM for Q=3 f32 (safe on
                    v7x's 64 MiB per-TC VMEM; v5e/v6e can take 1M).
    num_splits: leading "parallel" grid axis.  Default 1 (single-TC v5e/v6e);
                use 2 on dual-TensorCore chips (v7x / megacore).
    """
    B, T, Q = forecasts.shape
    M = B * T

    # Quantiles as static Python floats (baked into the kernel as scalars).
    q_np = np.atleast_1d(np.asarray(quantile, dtype=np.float32)).reshape(-1)
    if q_np.size == 1 and Q > 1:
        q_np = np.full((Q,), float(q_np[0]), dtype=np.float32)
    assert q_np.size == Q, "quantile must be scalar or have length Q"
    q_values = tuple(float(v) for v in q_np)

    # ---- lane/sublane-dense relayout (single HBM pass) ----------------------
    M128 = _round_up(M, 128)
    rows = M128 // 128
    pad = M128 - M
    fc2 = forecasts.reshape(M, Q)
    labf = label.reshape(-1)
    assert labf.shape[0] == M, "label must broadcast over the quantile axis"
    if pad:
        # <=127 columns; fuses with the transpose copy below.
        fc2 = jnp.pad(fc2, ((0, pad), (0, 0)))
        labf = jnp.pad(labf, (0, pad))
    fc3 = jnp.transpose(fc2).reshape(Q, rows, 128)   # one relayout pass (Q, rows, 128)
    lab3 = labf.reshape(rows, 128)                   # contiguous reshape (free)

    # ---- tiling --------------------------------------------------------------
    num_splits = max(1, int(num_splits))
    tm_default = max(8, (int(lanes_per_step) // 128) // 8 * 8)
    tm = rows if rows <= tm_default else tm_default
    steps_total = pl.cdiv(rows, tm)
    steps_per_split = int(pl.cdiv(steps_total, num_splits))

    # Clamp the row-block index so over-running splits re-read the last block;
    # the in-kernel mask (computed from the *unclamped* index) zeroes them out.
    def row_block(c, i):
        return jnp.minimum(c * steps_per_split + i, steps_total - 1)

    # ---- VMEM budget (sublane-accurate for the 3D packed blocks) -------------
    itemsize = jnp.dtype(forecasts.dtype).itemsize
    blk = tm * 128
    vmem_need = (2 * (Q + 1) * blk * itemsize      # double-buffered input blocks
                 + Q * blk * 4                     # f32 accumulator scratch
                 + 2 * 8 * 128 * 4)                # output block
    try:
        vmem_cap = int(pltpu.get_tpu_info().vmem_capacity_bytes)
    except Exception:
        vmem_cap = 128 << 20
    vmem_limit_bytes = int(min(max(vmem_need + (4 << 20), 16 << 20),
                               (vmem_cap * 3) // 4))

    kernel = functools.partial(
        _pinball_kernel, q_values=q_values, valid_cols=M, tm=tm,
        steps_per_split=steps_per_split)

    out = pl.pallas_call(
        kernel,
        out_shape=jax.ShapeDtypeStruct((num_splits, 8, 128), jnp.float32),
        grid_spec=pltpu.PrefetchScalarGridSpec(
            num_scalar_prefetch=0,
            grid=(num_splits, steps_per_split),
            in_specs=[
                pl.BlockSpec((tm, 128), lambda c, i: (row_block(c, i), 0)),      # label
                pl.BlockSpec((Q, tm, 128), lambda c, i: (0, row_block(c, i), 0)),  # forecasts
            ],
            out_specs=pl.BlockSpec((1, 8, 128), lambda c, i: (c, 0, 0)),
            scratch_shapes=[pltpu.VMEM((Q, tm, 128), jnp.float32)],
        ),
        compiler_params=pltpu.CompilerParams(
            dimension_semantics=("parallel", "arbitrary"),
            vmem_limit_bytes=vmem_limit_bytes,
        ),
    )(lab3, fc3)

    # Combine per-split partial sums; denominator is the true element count.
    return out[:, 0, 0].sum() / jnp.float32(M * Q)


def _pinball_loss_ref(label, forecasts, quantile):
    q = jnp.asarray(quantile, jnp.float32)
    labels = jnp.broadcast_to(label, forecasts.shape)
    errors = labels - forecasts
    loss = jnp.maximum(q * errors, (q - 1.0) * errors)
    return jnp.mean(loss)


if __name__ == "__main__":
    quantile = [0.1, 0.5, 0.9]
    key = jax.random.PRNGKey(0)

    # Case 1: small, "nice" shape.
    B, T, Q = 2, 8, 3
    k1, k2, k3, k4 = jax.random.split(key, 4)
    label = jax.random.normal(k1, (B, T, 1), dtype=jnp.float32)
    forecasts = jax.random.normal(k2, (B, T, Q), dtype=jnp.float32)
    loss = jax.block_until_ready(pinball_loss(label, forecasts, quantile))
    ref = _pinball_loss_ref(label, forecasts, quantile)
    assert jnp.allclose(loss, ref, atol=1e-5, rtol=1e-5), (loss, ref)

    # Case 2: shape not divisible by 128 (exercises the in-kernel masking path).
    B2, T2 = 3, 5
    label2 = jax.random.normal(k3, (B2, T2, 1), dtype=jnp.float32)
    forecasts2 = jax.random.normal(k4, (B2, T2, Q), dtype=jnp.float32)
    loss2 = jax.block_until_ready(pinball_loss(label2, forecasts2, quantile))
    ref2 = _pinball_loss_ref(label2, forecasts2, quantile)
    assert jnp.allclose(loss2, ref2, atol=1e-5, rtol=1e-5), (loss2, ref2)

    print("KERNEL_OK")
</pallas_src>

<mosaic_0001>
module attributes {stable_mosaic.version = 11 : i64} {
  func.func @_pinball_kernel(%arg0: i32, %arg1: i32, %arg2: memref<1x128xf32, #tpu.memory_space<vmem>>, %arg3: memref<3x1x128xf32, #tpu.memory_space<vmem>>, %arg4: memref<1x8x128xf32, #tpu.memory_space<vmem>>, %arg5: memref<3x1x128xf32, #tpu.memory_space<vmem>>) attributes {dimension_semantics = [#tpu.dimension_semantics<parallel>, #tpu.dimension_semantics<arbitrary>], iteration_bounds = array<i64: 1, 1>, scalar_prefetch = 0 : i64, scratch_operands = 1 : i64, tpu.core_type = #tpu.core_type<tc>, window_params = [{transform_indices = @transform_0, window_bounds = array<i64: 1, 128>}, {transform_indices = @transform_1, window_bounds = array<i64: 3, 1, 128>}, {transform_indices = @transform_2, window_bounds = array<i64: 1, 8, 128>}]} {
    %c0_i32 = arith.constant 0 : i32
    %0 = arith.cmpi eq, %arg1, %c0_i32 : i32
    %1 = arith.extui %0 : i1 to i32
    %c0_i32_0 = arith.constant 0 : i32
    %2 = arith.cmpi ne, %1, %c0_i32_0 : i32
    scf.if %2 {
      %cst_20 = arith.constant 0.000000e+00 : f32
      %42 = vector.broadcast %cst_20 : f32 to vector<3x1x128xf32>
      %c0_21 = arith.constant 0 : index
      %c0_22 = arith.constant 0 : index
      %c0_23 = arith.constant 0 : index
      %43 = vector.load %arg5[%c0_21, %c0_22, %c0_23] : memref<3x1x128xf32, #tpu.memory_space<vmem>>, vector<3x1x128xf32>
      tpu.vector_store %arg5[%c0_21, %c0_22, %c0_23], %42 {strides = array<i32>} : memref<3x1x128xf32, #tpu.memory_space<vmem>>, vector<3x1x128xf32>,
    } else {
    }
    %c0 = arith.constant 0 : index
    %c0_1 = arith.constant 0 : index
    %3 = vector.load %arg2[%c0, %c0_1] : memref<1x128xf32, #tpu.memory_space<vmem>>, vector<1x128xf32>
    %c0_2 = arith.constant 0 : index
    %c0_3 = arith.constant 0 : index
    %c0_4 = arith.constant 0 : index
    %4 = vector.load %arg3[%c0_2, %c0_3, %c0_4] : memref<3x1x128xf32, #tpu.memory_space<vmem>>, vector<1x1x128xf32>
    %5 = vector.shape_cast %4 : vector<1x1x128xf32> to vector<1x128xf32>
    %6 = arith.subf %3, %5 : vector<1x128xf32>
    %cst = arith.constant 1.000000e-01 : f32
    %7 = vector.broadcast %cst : f32 to vector<1x128xf32>
    %8 = arith.mulf %7, %6 : vector<1x128xf32>
    %cst_5 = arith.constant -0.899999976 : f32
    %9 = vector.broadcast %cst_5 : f32 to vector<1x128xf32>
    %10 = arith.mulf %9, %6 : vector<1x128xf32>
    %11 = arith.maximumf %8, %10 : vector<1x128xf32>
    %c1 = arith.constant 1 : index
    %c0_6 = arith.constant 0 : index
    %c0_7 = arith.constant 0 : index
    %12 = vector.load %arg3[%c1, %c0_6, %c0_7] : memref<3x1x128xf32, #tpu.memory_space<vmem>>, vector<1x1x128xf32>
    %13 = vector.shape_cast %12 : vector<1x1x128xf32> to vector<1x128xf32>
    %14 = arith.subf %3, %13 : vector<1x128xf32>
    %cst_8 = arith.constant 5.000000e-01 : f32
    %15 = vector.broadcast %cst_8 : f32 to vector<1x128xf32>
    %16 = arith.mulf %15, %14 : vector<1x128xf32>
    %cst_9 = arith.constant -5.000000e-01 : f32
    %17 = vector.broadcast %cst_9 : f32 to vector<1x128xf32>
    %18 = arith.mulf %17, %14 : vector<1x128xf32>
    %19 = arith.maximumf %16, %18 : vector<1x128xf32>
    %c2 = arith.constant 2 : index
    %c0_10 = arith.constant 0 : index
    %c0_11 = arith.constant 0 : index
    %20 = vector.load %arg3[%c2, %c0_10, %c0_11] : memref<3x1x128xf32, #tpu.memory_space<vmem>>, vector<1x1x128xf32>
    %21 = vector.shape_cast %20 : vector<1x1x128xf32> to vector<1x128xf32>
    %22 = arith.subf %3, %21 : vector<1x128xf32>
    %cst_12 = arith.constant 0.899999976 : f32
    %23 = vector.broadcast %cst_12 : f32 to vector<1x128xf32>
    %24 = arith.mulf %23, %22 : vector<1x128xf32>
    %cst_13 = arith.constant -0.100000024 : f32
    %25 = vector.broadcast %cst_13 : f32 to vector<1x128xf32>
    %26 = arith.mulf %25, %22 : vector<1x128xf32>
    %27 = arith.maximumf %24, %26 : vector<1x128xf32>
    %c1_i32 = arith.constant 1 : i32
    %28 = arith.muli %arg0, %c1_i32 : i32
    %29 = arith.addi %28, %arg1 : i32
    %c1_i32_14 = arith.constant 1 : i32
    %30 = arith.muli %29, %c1_i32_14 : i32
    %c1_i32_15 = arith.constant 1 : i32
    %31 = arith.addi %30, %c1_i32_15 : i32
    %c128_i32 = arith.constant 128 : i32
    %32 = arith.muli %31, %c128_i32 : i32
    %c16_i32 = arith.constant 16 : i32
    %33 = arith.cmpi sle, %32, %c16_i32 : i32
    %34 = arith.extui %33 : i1 to i32
    %c0_i32_16 = arith.constant 0 : i32
    %35 = arith.cmpi ne, %34, %c0_i32_16 : i32
    scf.if %35 {
      %c0_20 = arith.constant 0 : index
      %c0_21 = arith.constant 0 : index
      %c0_22 = arith.constant 0 : index
      %42 = vector.load %arg5[%c0_20, %c0_21, %c0_22] : memref<3x1x128xf32, #tpu.memory_space<vmem>>, vector<1x1x128xf32>
      %43 = vector.shape_cast %42 : vector<1x1x128xf32> to vector<1x128xf32>
      %44 = arith.addf %43, %11 : vector<1x128xf32>
      %c0_23 = arith.constant 0 : index
      %c0_24 = arith.constant 0 : index
      %c0_25 = arith.constant 0 : index
      %45 = vector.load %arg5[%c0_23, %c0_24, %c0_25] : memref<3x1x128xf32, #tpu.memory_space<vmem>>, vector<1x1x128xf32>
      %46 = vector.shape_cast %45 : vector<1x1x128xf32> to vector<1x128xf32>
      %47 = vector.shape_cast %44 : vector<1x128xf32> to vector<1x1x128xf32>
      tpu.vector_store %arg5[%c0_23, %c0_24, %c0_25], %47 {strides = array<i32>} : memref<3x1x128xf32, #tpu.memory_space<vmem>>, vector<1x1x128xf32>,
      %c1_26 = arith.constant 1 : index
      %c0_27 = arith.constant 0 : index
      %c0_28 = arith.constant 0 : index
      %48 = vector.load %arg5[%c1_26, %c0_27, %c0_28] : memref<3x1x128xf32, #tpu.memory_space<vmem>>, vector<1x1x128xf32>
      %49 = vector.shape_cast %48 : vector<1x1x128xf32> to vector<1x128xf32>
      %50 = arith.addf %49, %19 : vector<1x128xf32>
      %c1_29 = arith.constant 1 : index
      %c0_30 = arith.constant 0 : index
      %c0_31 = arith.constant 0 : index
      %51 = vector.load %arg5[%c1_29, %c0_30, %c0_31] : memref<3x1x128xf32, #tpu.memory_space<vmem>>, vector<1x1x128xf32>
      %52 = vector.shape_cast %51 : vector<1x1x128xf32> to vector<1x128xf32>
      %53 = vector.shape_cast %50 : vector<1x128xf32> to vector<1x1x128xf32>
      tpu.vector_store %arg5[%c1_29, %c0_30, %c0_31], %53 {strides = array<i32>} : memref<3x1x128xf32, #tpu.memory_space<vmem>>, vector<1x1x128xf32>,
      %c2_32 = arith.constant 2 : index
      %c0_33 = arith.constant 0 : index
      %c0_34 = arith.constant 0 : index
      %54 = vector.load %arg5[%c2_32, %c0_33, %c0_34] : memref<3x1x128xf32, #tpu.memory_space<vmem>>, vector<1x1x128xf32>
      %55 = vector.shape_cast %54 : vector<1x1x128xf32> to vector<1x128xf32>
      %56 = arith.addf %55, %27 : vector<1x128xf32>
      %c2_35 = arith.constant 2 : index
      %c0_36 = arith.constant 0 : index
      %c0_37 = arith.constant 0 : index
      %57 = vector.load %arg5[%c2_35, %c0_36, %c0_37] : memref<3x1x128xf32, #tpu.memory_space<vmem>>, vector<1x1x128xf32>
      %58 = vector.shape_cast %57 : vector<1x1x128xf32> to vector<1x128xf32>
      %59 = vector.shape_cast %56 : vector<1x128xf32> to vector<1x1x128xf32>
      tpu.vector_store %arg5[%c2_35, %c0_36, %c0_37], %59 {strides = array<i32>} : memref<3x1x128xf32, #tpu.memory_space<vmem>>, vector<1x1x128xf32>,
    } else {
    }
    %true = arith.constant true
    %36 = arith.xori %33, %true : i1
    %37 = arith.extui %36 : i1 to i32
    %c0_i32_17 = arith.constant 0 : i32
    %38 = arith.cmpi ne, %37, %c0_i32_17 : i32
    scf.if %38 {
      %42 = tpu.iota {dimensions = array<i32: 0>} : vector<1x128xi32>
      %43 = tpu.iota {dimensions = array<i32: 1>} : vector<1x128xi32>
      %44 = vector.broadcast %30 : i32 to vector<1x128xi32>
      %45 = arith.addi %44, %42 : vector<1x128xi32>
      %c128_i32_20 = arith.constant 128 : i32
      %46 = vector.broadcast %c128_i32_20 : i32 to vector<1x128xi32>
      %47 = arith.muli %45, %46 : vector<1x128xi32>
      %48 = arith.addi %47, %43 : vector<1x128xi32>
      %c16_i32_21 = arith.constant 16 : i32
      %49 = vector.broadcast %c16_i32_21 : i32 to vector<1x128xi32>
      %50 = arith.cmpi slt, %48, %49 : vector<1x128xi32>
      %c0_22 = arith.constant 0 : index
      %c0_23 = arith.constant 0 : index
      %c0_24 = arith.constant 0 : index
      %51 = vector.load %arg5[%c0_22, %c0_23, %c0_24] : memref<3x1x128xf32, #tpu.memory_space<vmem>>, vector<1x1x128xf32>
      %52 = vector.shape_cast %51 : vector<1x1x128xf32> to vector<1x128xf32>
      %cst_25 = arith.constant 0.000000e+00 : f32
      %53 = vector.broadcast %cst_25 : f32 to vector<1x128xf32>
      %54 = arith.select %50, %11, %53 : vector<1x128xi1>, vector<1x128xf32>
      %55 = arith.addf %52, %54 : vector<1x128xf32>
      %c0_26 = arith.constant 0 : index
      %c0_27 = arith.constant 0 : index
      %c0_28 = arith.constant 0 : index
      %56 = vector.load %arg5[%c0_26, %c0_27, %c0_28] : memref<3x1x128xf32, #tpu.memory_space<vmem>>, vector<1x1x128xf32>
      %57 = vector.shape_cast %56 : vector<1x1x128xf32> to vector<1x128xf32>
      %58 = vector.shape_cast %55 : vector<1x128xf32> to vector<1x1x128xf32>
      tpu.vector_store %arg5[%c0_26, %c0_27, %c0_28], %58 {strides = array<i32>} : memref<3x1x128xf32, #tpu.memory_space<vmem>>, vector<1x1x128xf32>,
      %c1_29 = arith.constant 1 : index
      %c0_30 = arith.constant 0 : index
      %c0_31 = arith.constant 0 : index
      %59 = vector.load %arg5[%c1_29, %c0_30, %c0_31] : memref<3x1x128xf32, #tpu.memory_space<vmem>>, vector<1x1x128xf32>
      %60 = vector.shape_cast %59 : vector<1x1x128xf32> to vector<1x128xf32>
      %cst_32 = arith.constant 0.000000e+00 : f32
      %61 = vector.broadcast %cst_32 : f32 to vector<1x128xf32>
      %62 = arith.select %50, %19, %61 : vector<1x128xi1>, vector<1x128xf32>
      %63 = arith.addf %60, %62 : vector<1x128xf32>
      %c1_33 = arith.constant 1 : index
      %c0_34 = arith.constant 0 : index
      %c0_35 = arith.constant 0 : index
      %64 = vector.load %arg5[%c1_33, %c0_34, %c0_35] : memref<3x1x128xf32, #tpu.memory_space<vmem>>, vector<1x1x128xf32>
      %65 = vector.shape_cast %64 : vector<1x1x128xf32> to vector<1x128xf32>
      %66 = vector.shape_cast %63 : vector<1x128xf32> to vector<1x1x128xf32>
      tpu.vector_store %arg5[%c1_33, %c0_34, %c0_35], %66 {strides = array<i32>} : memref<3x1x128xf32, #tpu.memory_space<vmem>>, vector<1x1x128xf32>,
      %c2_36 = arith.constant 2 : index
      %c0_37 = arith.constant 0 : index
      %c0_38 = arith.constant 0 : index
      %67 = vector.load %arg5[%c2_36, %c0_37, %c0_38] : memref<3x1x128xf32, #tpu.memory_space<vmem>>, vector<1x1x128xf32>
      %68 = vector.shape_cast %67 : vector<1x1x128xf32> to vector<1x128xf32>
      %cst_39 = arith.constant 0.000000e+00 : f32
      %69 = vector.broadcast %cst_39 : f32 to vector<1x128xf32>
      %70 = arith.select %50, %27, %69 : vector<1x128xi1>, vector<1x128xf32>
      %71 = arith.addf %68, %70 : vector<1x128xf32>
      %c2_40 = arith.constant 2 : index
      %c0_41 = arith.constant 0 : index
      %c0_42 = arith.constant 0 : index
      %72 = vector.load %arg5[%c2_40, %c0_41, %c0_42] : memref<3x1x128xf32, #tpu.memory_space<vmem>>, vector<1x1x128xf32>
      %73 = vector.shape_cast %72 : vector<1x1x128xf32> to vector<1x128xf32>
      %74 = vector.shape_cast %71 : vector<1x128xf32> to vector<1x1x128xf32>
      tpu.vector_store %arg5[%c2_40, %c0_41, %c0_42], %74 {strides = array<i32>} : memref<3x1x128xf32, #tpu.memory_space<vmem>>, vector<1x1x128xf32>,
    } else {
    }
    %c0_i32_18 = arith.constant 0 : i32
    %39 = arith.cmpi eq, %arg1, %c0_i32_18 : i32
    %40 = arith.extui %39 : i1 to i32
    %c0_i32_19 = arith.constant 0 : i32
    %41 = arith.cmpi ne, %40, %c0_i32_19 : i32
    scf.if %41 {
      %c0_20 = arith.constant 0 : index
      %c0_21 = arith.constant 0 : index
      %c0_22 = arith.constant 0 : index
      %42 = vector.load %arg5[%c0_20, %c0_21, %c0_22] : memref<3x1x128xf32, #tpu.memory_space<vmem>>, vector<3x1x128xf32>
      %43 = vector.shape_cast %42 : vector<3x1x128xf32> to vector<1x3x1x128xf32>
      %cst_23 = arith.constant dense<0.000000e+00> : vector<1xf32>
      %44 = vector.multi_reduction <add>, %43, %cst_23 [1, 2, 3] : vector<1x3x1x128xf32> to vector<1xf32>
      %45 = vector.shape_cast %44 : vector<1xf32> to vector<1x1x1x1xf32>
      %46 = vector.extract %45[0, 0, 0, 0] : f32 from vector<1x1x1x1xf32>
      %47 = vector.broadcast %46 : f32 to vector<1x8x128xf32>
      %c0_24 = arith.constant 0 : index
      %c0_25 = arith.constant 0 : index
      %c0_26 = arith.constant 0 : index
      %48 = vector.load %arg4[%c0_24, %c0_25, %c0_26] : memref<1x8x128xf32, #tpu.memory_space<vmem>>, vector<1x8x128xf32>
      tpu.vector_store %arg4[%c0_24, %c0_25, %c0_26], %47 {strides = array<i32>} : memref<1x8x128xf32, #tpu.memory_space<vmem>>, vector<1x8x128xf32>,
    } else {
    }
    return
  }
  func.func @transform_0(%arg0: i32, %arg1: i32) -> (i32, i32) {
    %c1_i32 = arith.constant 1 : i32
    %0 = arith.muli %arg0, %c1_i32 : i32
    %1 = arith.addi %0, %arg1 : i32
    %c0_i32 = arith.constant 0 : i32
    %2 = arith.minsi %1, %c0_i32 : i32
    %c0_i32_0 = arith.constant 0 : i32
    %c0_i32_1 = arith.constant 0 : i32
    return %2, %c0_i32_0 : i32, i32
  }
  func.func @transform_1(%arg0: i32, %arg1: i32) -> (i32, i32, i32) {
    %c1_i32 = arith.constant 1 : i32
    %0 = arith.muli %arg0, %c1_i32 : i32
    %1 = arith.addi %0, %arg1 : i32
    %c0_i32 = arith.constant 0 : i32
    %2 = arith.minsi %1, %c0_i32 : i32
    %c0_i32_0 = arith.constant 0 : i32
    %c0_i32_1 = arith.constant 0 : i32
    %c0_i32_2 = arith.constant 0 : i32
    return %c0_i32_0, %2, %c0_i32_1 : i32, i32, i32
  }
  func.func @transform_2(%arg0: i32, %arg1: i32) -> (i32, i32, i32) {
    %c0_i32 = arith.constant 0 : i32
    %c0_i32_0 = arith.constant 0 : i32
    %c0_i32_1 = arith.constant 0 : i32
    return %arg0, %c0_i32, %c0_i32_0 : i32, i32, i32
  }
}

</mosaic_0001>

<llo_original>
// kernel: tpu_custom_call.1
$region0: #{tpu_custom_call.1}
  #allocation0 [shape = 'u32[]', space=smem, size = 0x4, offset = 0x4, fixed_abs, tag = 'smem constant byte address 0x4 - core index']
  #allocation1 [shape = 'u32[144,128]{1,0:T(1,128)}', space=vmem, size = 0x12000, scoped, tag = 'internal scratch']
  #allocation2 [shape = 'f32[3,1,128]{2,1,0:T(1,128)}', space=vmem, size = 0x600, scoped, tag = 'scratch operand']
  %s0 = inlined_call_operand.hbm [shape: f32[1,128], index: 0, kind: input, shape index: {}]
  %s1 = inlined_call_operand.vmem [shape: f32[3,1,128], index: 1, kind: input, shape index: {}]
  %s2 = inlined_call_operand.hbm [shape: f32[1,8,128], index: 2, kind: output, shape index: {}]
  %s3 = sld [smem:[#allocation0]]
  $region38: #{tpu_custom_call.1} parent=0
    _
  %s5 = ssub.s32 1, %s3
  %s6 = scalar_select 0, %s5, %s3
  $region1: #{tpu_custom_call.1} parent=0
    #allocation3 [shape = 'u8[512]{0}', space=vmem, size = 0x400, scoped, tag = 'input window, operand 0, single buffered']
    #allocation4 [shape = 's32[1]{0}', space=sflag, size = 0x4, scoped, tag = 'scoped memory for tpu_custom_call.1']
    #allocation5 [shape = 's32[1]{0}', space=sflag, size = 0x4, scoped, tag = 'scoped memory for tpu_custom_call.1']
    #allocation6 [shape = 'u8[4096]{0}', space=vmem, size = 0x1000, scoped, tag = 'output window, operand 0, single buffered']
    %7 = vsyncpa [#allocation4], 0
    %8 = vsyncpa [#allocation5], 0
    // Predicated region
    $region2: #{tpu_custom_call.1} parent=1 // pred_check
      _
    $region3: #{tpu_custom_call.1} parent=1 // pred_check_branch
      %10 = sbr.rel (0) target = $region5
    $region4: #{tpu_custom_call.1} parent=1 // pred_region
      %s11 = sadd.s32 0, 0
      %p12 = scmp.lt.s32.totalorder %s11, 0
      %s13 = scalar_select %p12, %s11, 0
      %s15 = ssub.s32 16, 16
      %16 = vsyncadd [#allocation4], %s15
      %s17 = smul.addr %s13, 16
      %s18 = scalar_lea.hbm %s0, %s17
      %s20 = sshll.u32 [#allocation3], 4
      %s21 = int_to_ptr.vmem [resolvable:$true] %s20
      %23 = dma.hbm_to_vmem [thread:$0]  %s18, 16, %s21, [#allocation4]
    $region5: #{tpu_custom_call.1} parent=1 // pred_fallthru
      _
    // Predicated region
    $region6: #{tpu_custom_call.1} parent=1 // pred_check
      _
    $region7: #{tpu_custom_call.1} parent=1 // pred_check_branch
      %25 = sbr.rel (0) target = $region9
    $region8: #{tpu_custom_call.1} parent=1 // pred_region
      %s26 = sadd.s32 0, 0
      %p27 = scmp.lt.s32.totalorder %s26, 0
      %s28 = scalar_select %p27, %s26, 0
      %p29 = scmp.lt.s32.totalorder %s28, 0
      %s30 = scalar_select %p29, %s28, 0
      %s31 = scalar_lea.vmem %s1, %s30
      %s32 = sadd.s32 0, 0
      %p33 = scmp.lt.s32.totalorder %s32, 0
      %s34 = scalar_select %p33, %s32, 0
    $region9: #{tpu_custom_call.1} parent=1 // pred_fallthru
      _
    // Predicated region
    $region10: #{tpu_custom_call.1} parent=1 // pred_check
      _
    $region11: #{tpu_custom_call.1} parent=1 // pred_check_branch
      %36 = sbr.rel (0) target = $region13
    $region12: #{tpu_custom_call.1} parent=1 // pred_region
      %37 = dma.done [#allocation4], 16
    $region13: #{tpu_custom_call.1} parent=1 // pred_fallthru
      _
    %s38 = sadd.s32 0, 0
    %p39 = scmp.lt.s32.totalorder %s38, 0
    %s40 = scalar_select %p39, %s38, 0
    %p41 = scmp.lt.s32.totalorder %s40, 0
    %s42 = scalar_select %p41, %s40, 0
    %s43 = scalar_lea.vmem %s1, %s42
    %s44 = sadd.s32 0, 0
    %p45 = scmp.lt.s32.totalorder %s44, 0
    %s46 = scalar_select %p45, %s44, 0
    %s47 = sadd.s32 0, 0
    %p48 = scmp.lt.s32.totalorder %s47, 0
    %s49 = scalar_select %p48, %s47, 0
    %p50 = scmp.lt.s32.totalorder %s49, 0
    %s51 = scalar_select %p50, %s49, 0
    %s52 = scalar_lea.vmem %s1, %s51
    %s53 = sadd.s32 0, 0
    %p54 = scmp.lt.s32.totalorder %s53, 0
    %s55 = scalar_select %p54, %s53, 0
    %p56 = scmp.eq.s32.totalorder 0, 0
    // Predicated region
    $region14: #{tpu_custom_call.1} parent=1 // pred_check
      %p57 = pneg %p56
    $region15: #{tpu_custom_call.1} parent=1 // pred_check_branch
      %59 = sbr.rel (%p57) target = $region17
    $region16: #{tpu_custom_call.1} parent=1 // pred_region
      %60 = vst [vmem:[#allocation2] sm:$0x1] 0.0
      %61 = vst [vmem:[#allocation2 + $0x1] sm:$0x1] 0.0
      %62 = vst [vmem:[#allocation2 + $0x2] sm:$0x1] 0.0
    $region17: #{tpu_custom_call.1} parent=1 // pred_fallthru
      _
    %v63 = vld [vmem:[#allocation3] sm:$0x1]
    %v64 = vld [vmem:[%s52] sm:$0x1]
    %v65 = vsub.f32 %v63, %v64
    %v66 = vmul.f32 %v65, 0.1
    %v67 = vmul.f32 %v65, -0.9
    %v68 = vmax.f32 %v66, %v67
    %s69 = scalar_lea.vmem %s52, 1
    %v70 = vld [vmem:[%s69] sm:$0x1]
    %v71 = vsub.f32 %v63, %v70
    %v72 = vmul.f32 %v71, 0.5
    %v73 = vmul.f32 %v71, -0.5
    %v74 = vmax.f32 %v72, %v73
    %s75 = scalar_lea.vmem %s52, 2
    %v76 = vld [vmem:[%s75] sm:$0x1]
    %v77 = vsub.f32 %v63, %v76
    %v78 = vmul.f32 %v77, 0.9
    %v79 = vmul.f32 %v77, -0.100000024
    %v80 = vmax.f32 %v78, %v79
    %s81 = sadd.s32 0, 0
    %s82 = sadd.s32 %s81, 1
    %s83 = smul.u32 %s82, 128
    %p84 = scmp.le.s32.totalorder %s83, 16
    // Predicated region
    $region18: #{tpu_custom_call.1} parent=1 // pred_check
      %p85 = pneg %p84
    $region19: #{tpu_custom_call.1} parent=1 // pred_check_branch
      %87 = sbr.rel (%p85) target = $region21
    $region20: #{tpu_custom_call.1} parent=1 // pred_region
      %v88 = vld [vmem:[#allocation2] sm:$0x1]
      %v89 = vadd.f32 %v88, %v68
      %90 = vst [vmem:[#allocation2] sm:$0x1] %v89
      %s91 = scalar_lea.vmem [#allocation2], 1
      %v92 = vld [vmem:[%s91] sm:$0x1]
      %v93 = vadd.f32 %v92, %v74
      %94 = vst [vmem:[%s91] sm:$0x1] %v93
      %s95 = scalar_lea.vmem [#allocation2], 2
      %v96 = vld [vmem:[%s95] sm:$0x1]
      %v97 = vadd.f32 %v96, %v80
      %98 = vst [vmem:[%s95] sm:$0x1] %v97
    $region21: #{tpu_custom_call.1} parent=1 // pred_fallthru
      _
    %p99 = scmp.gt.s32.totalorder %s83, 16
    // Predicated region
    $region22: #{tpu_custom_call.1} parent=1 // pred_check
      %p100 = pneg %p99
    $region23: #{tpu_custom_call.1} parent=1 // pred_check_branch
      %102 = sbr.rel (%p100) target = $region25
    $region24: #{tpu_custom_call.1} parent=1 // pred_region
      %v103 = vlaneseq
      %v104 = vshrl.u32 %v103, 7
      %v105 = vlaneseq
      %v106 = vand.u32 %v105, 127
      %v107 = vstv %s81
      %v108 = vadd.s32 %v107, %v104
      %v109 = vmul.u32 %v108, 128
      %v110 = vadd.s32 %v109, %v106
      %vm111 = vcmp.lt.s32.totalorder %v110, 16
      %v112 = vld [vmem:[#allocation2] sm:$0x1]
      %v113 = vsel %vm111, %v68, 0.0
      %v114 = vadd.f32 %v112, %v113
      %115 = vst [vmem:[#allocation2] sm:$0x1] %v114
      %s116 = scalar_lea.vmem [#allocation2], 1
      %v117 = vld [vmem:[%s116] sm:$0x1]
      %v118 = vsel %vm111, %v74, 0.0
      %v119 = vadd.f32 %v117, %v118
      %120 = vst [vmem:[%s116] sm:$0x1] %v119
      %s121 = scalar_lea.vmem [#allocation2], 2
      %v122 = vld [vmem:[%s121] sm:$0x1]
      %v123 = vsel %vm111, %v80, 0.0
      %v124 = vadd.f32 %v122, %v123
      %125 = vst [vmem:[%s121] sm:$0x1] %v124
    $region25: #{tpu_custom_call.1} parent=1 // pred_fallthru
      _
    // Predicated region
    $region26: #{tpu_custom_call.1} parent=1 // pred_check
      %p126 = pneg %p56
    $region27: #{tpu_custom_call.1} parent=1 // pred_check_branch
      %128 = sbr.rel (%p126) target = $region29
    $region28: #{tpu_custom_call.1} parent=1 // pred_region
      %v129 = vld [vmem:[#allocation2] sm:$0x1]
      %v130 = vld [vmem:[#allocation2 + $0x1] sm:$0x1]
      %v131 = vld [vmem:[#allocation2 + $0x2] sm:$0x1]
      %vm132 = vcmask 1040384
      %v133 = vsel %vm132, %v129, 0.0
      %v134 = vsel %vm132, %v130, 0.0
      %v135 = vadd.f32 %v133, %v134
      %v136 = vsel %vm132, %v131, 0.0
      %v137 = vadd.f32 %v135, %v136
      %138 = vadd.xlane.f32.xlu0 %v137
      %v139 = vpop.xlane.xlu0 %138
      %v140 = vrot.slane %v139, 4
      %v141 = vadd.f32 %v139, %v140
      %v142 = vrot.slane %v141, 2
      %v143 = vadd.f32 %v141, %v142
      %v144 = vrot.slane %v143, 1
      %v145 = vadd.f32 %v143, %v144
      %s146 = vtos %v145
      %v147 = vstv %s146
      %148 = vst [vmem:[#allocation6] sm:$0xff] %v147
    $region29: #{tpu_custom_call.1} parent=1 // pred_fallthru
      _
    // Predicated region
    $region30: #{tpu_custom_call.1} parent=1 // pred_check
      _
    $region31: #{tpu_custom_call.1} parent=1 // pred_check_branch
      %150 = sbr.rel (0) target = $region33
    $region32: #{tpu_custom_call.1} parent=1 // pred_region
      %s152 = ssub.s32 128, 128
      %153 = vsyncadd [#allocation5], %s152
      %s155 = sshll.u32 [#allocation6], 4
      %s156 = int_to_ptr.vmem [resolvable:$true] %s155
      %158 = dma.vmem_to_hbm [thread:$0]  %s156, 128, %s2, [#allocation5]
    $region33: #{tpu_custom_call.1} parent=1 // pred_fallthru
      _
    // Predicated region
    $region34: #{tpu_custom_call.1} parent=1 // pred_check
      _
    $region35: #{tpu_custom_call.1} parent=1 // pred_check_branch
      %160 = sbr.rel (0) target = $region37
    $region36: #{tpu_custom_call.1} parent=1 // pred_region
      %161 = dma.done [#allocation5], 128
    $region37: #{tpu_custom_call.1} parent=1 // pred_fallthru
      _
    %162 = vsyncpa [#allocation4], 1
    %163 = vsyncpa [#allocation5], 1

</llo_original>
